<compile_context>
chip_gen: v5e
topology: v5e:2x2
jax: 0.10.0
libtpu: 0.0.40
codegen_flags: <defaults>
</compile_context>

<pallas_src>
import functools

import jax
import jax.numpy as jnp
from jax.experimental import pallas as pl
from jax.experimental.pallas import tpu as pltpu

BN_EPS = 1e-5


# ---------------------------------------------------------------------------
# Kernels
# ---------------------------------------------------------------------------
def _conv_stats_kernel(x_ref, m_ref, p_ref, stats_ref, *, K, TH):
    """Fused 3-branch conv on one (batch, H-tile) block, reduced in-register to
    per-branch per-channel sum / sum-of-squares partials."""
    x = x_ref[...]                                    # (TH + 2P, Wpad*Cin)
    acc = jnp.zeros((TH, m_ref.shape[-1]), jnp.float32)   # (TH, W*3*Cout), lane-dense
    for kh in range(K):                               # K matmuls per tile (branches fused)
        acc = acc + jax.lax.dot_general(
            x[kh:kh + TH, :], m_ref[kh],
            (((1,), (0,)), ((), ())),
            preferred_element_type=jnp.float32)
    red = jnp.concatenate(
        [jnp.sum(acc, axis=0, keepdims=True),
         jnp.sum(acc * acc, axis=0, keepdims=True)], axis=0)     # (2, W*3C)
    # Project (2, W*3C) -> (2, 3C) with a 0/1 matrix: per-channel partial sum/sumsq
    # stays on the MXU and needs no in-kernel re-layout.
    stats_ref[...] = jax.lax.dot_general(
        red, p_ref[...], (((1,), (0,)), ((), ())),
        preferred_element_type=jnp.float32)


def _conv_apply_kernel(x_ref, m_ref, b_ref, out_ref, *, K, TH):
    """BN-folded fused conv: out = conv(x, W_folded) + bias; lane-dense store."""
    x = x_ref[...]                                    # (TH + 2P, Wpad*Cin)
    acc = jnp.zeros((TH, m_ref.shape[-1]), jnp.float32)   # (TH, W*Cout)
    for kh in range(K):
        acc = acc + jax.lax.dot_general(
            x[kh:kh + TH, :], m_ref[kh],
            (((1,), (0,)), ((), ())),
            preferred_element_type=jnp.float32)
    out_ref[...] = (acc + b_ref[...]).astype(out_ref.dtype)


# ---------------------------------------------------------------------------
# Wrapper helpers
# ---------------------------------------------------------------------------
def _pick_tile_h(H):
    for th in (64, 32, 16, 8):
        if H % th == 0 and H // th >= 2:
            return th
    return H


def _band_matrix(band_kkio, W):
    """band_kkio: (K, Kw, Cin, Co) -> (K, (W+Kw-1)*Cin, W*Co) banded matrix with
    M[kh, (w+kw)*Cin + ci, w*Co + c] = band[kh, kw, ci, c] (zeros elsewhere)."""
    K, Kw, Cin, Co = band_kkio.shape
    Wpad = W + Kw - 1
    m = jnp.zeros((K, Wpad, Cin, W, Co), jnp.float32)
    for kw in range(Kw):
        shift = jnp.eye(Wpad, W, k=-kw, dtype=jnp.float32)   # [win, w] = 1 iff win == w+kw
        m = m + (band_kkio[:, kw].astype(jnp.float32)[:, None, :, None, :]
                 * shift[None, :, None, :, None])
    return m.reshape(K, Wpad * Cin, W * Co)


def acblock_forward(x_nchw, params, *, kernel_size, padding):
    """x_nchw: (N, Cin, H, W). Returns (N, Cout, H, W); matches ACBlock.forward
    (deploy=False, training-mode BN, no last_bn)."""
    K, PAD = kernel_size, padding
    assert PAD - K // 2 == 0, "covers the Identity-crop case (padding == kernel_size//2)"

    x = jnp.transpose(x_nchw, (0, 2, 3, 1))                       # NCHW -> NHWC
    N, H, W, Cin = x.shape
    Cout = params["wsq"].shape[0]
    C3 = 3 * Cout
    dtype = x.dtype

    TH = _pick_tile_h(H)
    num_ht = H // TH
    THp = TH + 2 * PAD
    Wpad = W + 2 * PAD
    WpC = Wpad * Cin

    # Padded, (W,Cin)-flattened input; each H-tile carries its own halo rows so a grid
    # step only needs a (THp, Wpad*Cin) slab (halo duplication factor THp/TH).
    xpad = jnp.pad(x, ((0, 0), (PAD, PAD), (PAD, PAD), (0, 0))).reshape(N, H + 2 * PAD, WpC)
    x_tiles = jnp.stack([xpad[:, t * TH:t * TH + THp, :] for t in range(num_ht)], axis=1)

    # PyTorch weight layouts -> tap-major layouts
    wsq_t = jnp.transpose(params["wsq"], (2, 3, 1, 0))            # (K, K, Cin, Cout)
    wver_t = jnp.transpose(params["wver"][:, :, :, 0], (2, 1, 0)) # (K, Cin, Cout), kh axis
    whor_t = jnp.transpose(params["whor"][:, :, 0, :], (2, 1, 0)) # (K, Cin, Cout), kw axis

    # --- pass 1: fused 3-branch conv -> per-channel batch statistics -------------
    band3 = jnp.zeros((K, K, Cin, C3), jnp.float32)
    band3 = band3.at[:, :, :, 0:Cout].set(wsq_t)
    band3 = band3.at[:, PAD, :, Cout:2 * Cout].set(wver_t)        # Kx1 conv == kw=PAD taps
    band3 = band3.at[PAD, :, :, 2 * Cout:].set(whor_t)            # 1xK conv == kh=PAD taps
    m_stats = _band_matrix(band3, W).astype(dtype)                # (K, WpC, W*3C)
    proj = jnp.tile(jnp.eye(C3, dtype=jnp.float32), (W, 1))       # (W*3C, 3C)

    itemsize = jnp.dtype(dtype).itemsize
    flops1 = 2 * N * num_ht * K * TH * WpC * (W * C3)
    bytes1 = itemsize * (x_tiles.size + m_stats.size) + 4 * (proj.size + N * num_ht * 2 * C3)
    stats = pl.pallas_call(
        functools.partial(_conv_stats_kernel, K=K, TH=TH),
        out_shape=jax.ShapeDtypeStruct((N, num_ht, 2, C3), jnp.float32),
        grid=(N, num_ht),
        in_specs=[
            pl.BlockSpec((None, None, THp, WpC), lambda n, t: (n, t, 0, 0)),
            pl.BlockSpec((K, WpC, W * C3), lambda n, t: (0, 0, 0)),
            pl.BlockSpec((W * C3, C3), lambda n, t: (0, 0)),
        ],
        out_specs=pl.BlockSpec((None, None, 2, C3), lambda n, t: (n, t, 0, 0)),
        compiler_params=pltpu.CompilerParams(
            dimension_semantics=("parallel", "parallel"),
            vmem_limit_bytes=32 * 1024 * 1024),
        cost_estimate=pl.CostEstimate(flops=flops1, transcendentals=0,
                                      bytes_accessed=int(bytes1)),
    )(x_tiles, m_stats, proj)

    # --- fold training-mode BN (biased batch var) into conv weights + one bias ---
    count = N * H * W
    tot = jnp.sum(stats, axis=(0, 1))                             # (2, 3C)
    mean = tot[0] / count
    var = jnp.maximum(tot[1] / count - mean * mean, 0.0)
    gamma = jnp.concatenate([params["gsq"], params["gver"], params["ghor"]])
    beta = jnp.concatenate([params["bsq"], params["bver"], params["bhor"]])
    scale = gamma * jax.lax.rsqrt(var + BN_EPS)                   # (3C,)
    shift = beta - mean * scale                                   # (3C,)

    band_f = wsq_t * scale[None, None, None, 0:Cout]
    band_f = band_f.at[:, PAD, :, :].add(wver_t * scale[None, None, Cout:2 * Cout])
    band_f = band_f.at[PAD, :, :, :].add(whor_t * scale[None, None, 2 * Cout:])
    m_out = _band_matrix(band_f, W).astype(dtype)                 # (K, WpC, W*Cout)
    bias = shift[0:Cout] + shift[Cout:2 * Cout] + shift[2 * Cout:]
    bias_flat = jnp.tile(bias, W).reshape(1, W * Cout).astype(jnp.float32)

    # --- pass 2: BN-folded conv with lane-dense (TH, W*Cout) output ---------------
    flops2 = 2 * N * num_ht * K * TH * WpC * (W * Cout)
    bytes2 = itemsize * (x_tiles.size + m_out.size + N * H * W * Cout) + 4 * bias_flat.size
    y = pl.pallas_call(
        functools.partial(_conv_apply_kernel, K=K, TH=TH),
        out_shape=jax.ShapeDtypeStruct((N, num_ht, TH, W * Cout), dtype),
        grid=(N, num_ht),
        in_specs=[
            pl.BlockSpec((None, None, THp, WpC), lambda n, t: (n, t, 0, 0)),
            pl.BlockSpec((K, WpC, W * Cout), lambda n, t: (0, 0, 0)),
            pl.BlockSpec((1, W * Cout), lambda n, t: (0, 0)),
        ],
        out_specs=pl.BlockSpec((None, None, TH, W * Cout), lambda n, t: (n, t, 0, 0)),
        compiler_params=pltpu.CompilerParams(
            dimension_semantics=("parallel", "parallel"),
            vmem_limit_bytes=32 * 1024 * 1024),
        cost_estimate=pl.CostEstimate(flops=flops2, transcendentals=0,
                                      bytes_accessed=int(bytes2)),
    )(x_tiles, m_out, bias_flat)

    out_nhwc = y.reshape(N, H, W, Cout)                           # free: (t,th)->H, (w,c) split
    return jnp.transpose(out_nhwc, (0, 3, 1, 2))                  # NHWC -> NCHW

    # TODO(synk): deploy=True (fused_conv) and use_last_bn branches, and the BN
    # running_mean/running_var state updates, are not emitted by this forward-only kernel.


# ---------------------------------------------------------------------------
# Pure-JAX reference (lax.conv) for validation
# ---------------------------------------------------------------------------
def _reference_forward(x_nchw, params, *, kernel_size, padding):
    K, PAD = kernel_size, padding
    x = jnp.transpose(x_nchw, (0, 2, 3, 1))
    dn = jax.lax.conv_dimension_numbers(x.shape, (K, K, 1, 1),
                                        ("NHWC", "HWIO", "NHWC"))

    def conv(w_hwio, pad):
        return jax.lax.conv_general_dilated(x, w_hwio, (1, 1), pad,
                                            dimension_numbers=dn)

    def bn(y, g, b):
        m = jnp.mean(y, axis=(0, 1, 2), keepdims=True)
        v = jnp.mean((y - m) ** 2, axis=(0, 1, 2), keepdims=True)
        return (y - m) / jnp.sqrt(v + BN_EPS) * g.reshape(1, 1, 1, -1) \
               + b.reshape(1, 1, 1, -1)

    wsq = jnp.transpose(params["wsq"], (2, 3, 1, 0))
    wver = jnp.transpose(params["wver"], (2, 3, 1, 0))
    whor = jnp.transpose(params["whor"], (2, 3, 1, 0))

    sq = bn(conv(wsq, ((PAD, PAD), (PAD, PAD))), params["gsq"], params["bsq"])
    ve = bn(conv(wver, ((PAD, PAD), (0, 0))), params["gver"], params["bver"])
    ho = bn(conv(whor, ((0, 0), (PAD, PAD))), params["ghor"], params["bhor"])
    return jnp.transpose(sq + ve + ho, (0, 3, 1, 2))


if __name__ == "__main__":
    # Small shapes consistent with the module: N=2, Cin=4, Cout=8, H=W=16, K=3, pad=1
    N, Cin, Cout, H, W = 2, 4, 8, 16, 16
    K, PAD = 3, 1

    key = jax.random.PRNGKey(0)
    k0, k1, k2, k3 = jax.random.split(key, 4)

    x = jax.random.normal(k0, (N, Cin, H, W), dtype=jnp.float32)

    params = {
        # conv weights in PyTorch layout (Cout, Cin, kh, kw), bias=False
        "wsq": 0.1 * jax.random.normal(k1, (Cout, Cin, K, K), dtype=jnp.float32),
        "wver": 0.1 * jax.random.normal(k2, (Cout, Cin, K, 1), dtype=jnp.float32),
        "whor": 0.1 * jax.random.normal(k3, (Cout, Cin, 1, K), dtype=jnp.float32),
        # BatchNorm affine params (use_affine=True), deterministic non-trivial values
        "gsq": 1.0 + 0.10 * jnp.arange(Cout, dtype=jnp.float32),
        "bsq": 0.05 * jnp.arange(Cout, dtype=jnp.float32),
        "gver": 1.0 - 0.05 * jnp.arange(Cout, dtype=jnp.float32),
        "bver": -0.03 * jnp.arange(Cout, dtype=jnp.float32),
        "ghor": 0.9 + 0.02 * jnp.arange(Cout, dtype=jnp.float32),
        "bhor": 0.01 * jnp.arange(Cout, dtype=jnp.float32),
    }

    fwd = jax.jit(functools.partial(acblock_forward, kernel_size=K, padding=PAD))
    out = jax.block_until_ready(fwd(x, params))

    ref = _reference_forward(x, params, kernel_size=K, padding=PAD)
    assert out.shape == (N, Cout, H, W)
    err = jnp.max(jnp.abs(out - ref))
    assert jnp.allclose(out, ref, atol=1e-3, rtol=1e-3), f"max abs err {err}"

    print("KERNEL_OK")
</pallas_src>

<mosaic_0001>
module attributes {stable_mosaic.version = 11 : i64} {
  func.func @_conv_stats_kernel(%arg0: i32, %arg1: i32, %arg2: memref<1x1x10x72xf32, #tpu.memory_space<vmem>>, %arg3: memref<3x72x384xf32, #tpu.memory_space<vmem>>, %arg4: memref<384x24xf32, #tpu.memory_space<vmem>>, %arg5: memref<1x1x2x24xf32, #tpu.memory_space<vmem>>) attributes {dimension_semantics = [#tpu.dimension_semantics<parallel>, #tpu.dimension_semantics<parallel>], iteration_bounds = array<i64: 2, 2>, scalar_prefetch = 0 : i64, scratch_operands = 0 : i64, tpu.core_type = #tpu.core_type<tc>, window_params = [{transform_indices = @transform_0, window_bounds = array<i64: 1, 1, 10, 72>}, {pipeline_mode = #tpu.pipeline_mode<synchronous>, transform_indices = @transform_1, window_bounds = array<i64: 3, 72, 384>}, {pipeline_mode = #tpu.pipeline_mode<synchronous>, transform_indices = @transform_2, window_bounds = array<i64: 384, 24>}, {transform_indices = @transform_3, window_bounds = array<i64: 1, 1, 2, 24>}]} {
    %c0 = arith.constant 0 : index
    %c0_0 = arith.constant 0 : index
    %c0_1 = arith.constant 0 : index
    %c0_2 = arith.constant 0 : index
    %0 = vector.load %arg2[%c0, %c0_0, %c0_1, %c0_2] : memref<1x1x10x72xf32, #tpu.memory_space<vmem>>, vector<1x1x10x72xf32>
    %1 = vector.shape_cast %0 : vector<1x1x10x72xf32> to vector<10x72xf32>
    %cst = arith.constant 0.000000e+00 : f32
    %2 = vector.broadcast %cst : f32 to vector<8x384xf32>
    %3 = vector.extract_strided_slice %1 {offsets = [0, 0], sizes = [8, 72], strides = [1, 1]} : vector<10x72xf32> to vector<8x72xf32>
    %c0_3 = arith.constant 0 : index
    %c0_4 = arith.constant 0 : index
    %c0_5 = arith.constant 0 : index
    %4 = vector.load %arg3[%c0_3, %c0_4, %c0_5] : memref<3x72x384xf32, #tpu.memory_space<vmem>>, vector<1x72x384xf32>
    %5 = vector.shape_cast %4 : vector<1x72x384xf32> to vector<72x384xf32>
    %cst_6 = arith.constant dense<0.000000e+00> : vector<8x384xf32>
    %6 = tpu.matmul %3, %5, %cst_6 {dimension_numbers = #tpu.dot_dimension_numbers<[1], [0], [0], [1], [0, 0, 1, 1], [], []>} : vector<8x72xf32>, vector<72x384xf32>, vector<8x384xf32> -> vector<8x384xf32>
    %7 = arith.addf %2, %6 : vector<8x384xf32>
    %8 = vector.extract_strided_slice %1 {offsets = [1, 0], sizes = [8, 72], strides = [1, 1]} : vector<10x72xf32> to vector<8x72xf32>
    %c1 = arith.constant 1 : index
    %c0_7 = arith.constant 0 : index
    %c0_8 = arith.constant 0 : index
    %9 = vector.load %arg3[%c1, %c0_7, %c0_8] : memref<3x72x384xf32, #tpu.memory_space<vmem>>, vector<1x72x384xf32>
    %10 = vector.shape_cast %9 : vector<1x72x384xf32> to vector<72x384xf32>
    %cst_9 = arith.constant dense<0.000000e+00> : vector<8x384xf32>
    %11 = tpu.matmul %8, %10, %cst_9 {dimension_numbers = #tpu.dot_dimension_numbers<[1], [0], [0], [1], [0, 0, 1, 1], [], []>} : vector<8x72xf32>, vector<72x384xf32>, vector<8x384xf32> -> vector<8x384xf32>
    %12 = arith.addf %7, %11 : vector<8x384xf32>
    %13 = vector.extract_strided_slice %1 {offsets = [2, 0], sizes = [8, 72], strides = [1, 1]} : vector<10x72xf32> to vector<8x72xf32>
    %c2 = arith.constant 2 : index
    %c0_10 = arith.constant 0 : index
    %c0_11 = arith.constant 0 : index
    %14 = vector.load %arg3[%c2, %c0_10, %c0_11] : memref<3x72x384xf32, #tpu.memory_space<vmem>>, vector<1x72x384xf32>
    %15 = vector.shape_cast %14 : vector<1x72x384xf32> to vector<72x384xf32>
    %cst_12 = arith.constant dense<0.000000e+00> : vector<8x384xf32>
    %16 = tpu.matmul %13, %15, %cst_12 {dimension_numbers = #tpu.dot_dimension_numbers<[1], [0], [0], [1], [0, 0, 1, 1], [], []>} : vector<8x72xf32>, vector<72x384xf32>, vector<8x384xf32> -> vector<8x384xf32>
    %17 = arith.addf %12, %16 : vector<8x384xf32>
    %cst_13 = arith.constant dense<0.000000e+00> : vector<384xf32>
    %18 = vector.multi_reduction <add>, %17, %cst_13 [0] : vector<8x384xf32> to vector<384xf32>
    %19 = vector.shape_cast %18 : vector<384xf32> to vector<1x384xf32>
    %20 = arith.mulf %17, %17 : vector<8x384xf32>
    %cst_14 = arith.constant dense<0.000000e+00> : vector<384xf32>
    %21 = vector.multi_reduction <add>, %20, %cst_14 [0] : vector<8x384xf32> to vector<384xf32>
    %22 = vector.shape_cast %21 : vector<384xf32> to vector<1x384xf32>
    %23 = tpu.concatenate %19, %22 in 0 : vector<1x384xf32>, vector<1x384xf32> -> vector<2x384xf32>
    %c0_15 = arith.constant 0 : index
    %c0_16 = arith.constant 0 : index
    %24 = vector.load %arg4[%c0_15, %c0_16] : memref<384x24xf32, #tpu.memory_space<vmem>>, vector<384x24xf32>
    %cst_17 = arith.constant dense<0.000000e+00> : vector<2x24xf32>
    %25 = tpu.matmul %23, %24, %cst_17 {dimension_numbers = #tpu.dot_dimension_numbers<[1], [0], [0], [1], [0, 0, 1, 1], [], []>} : vector<2x384xf32>, vector<384x24xf32>, vector<2x24xf32> -> vector<2x24xf32>
    %c0_18 = arith.constant 0 : index
    %c0_19 = arith.constant 0 : index
    %c0_20 = arith.constant 0 : index
    %c0_21 = arith.constant 0 : index
    %26 = vector.load %arg5[%c0_18, %c0_19, %c0_20, %c0_21] : memref<1x1x2x24xf32, #tpu.memory_space<vmem>>, vector<1x1x2x24xf32>
    %27 = vector.shape_cast %26 : vector<1x1x2x24xf32> to vector<2x24xf32>
    %28 = vector.shape_cast %25 : vector<2x24xf32> to vector<1x1x2x24xf32>
    tpu.vector_store %arg5[%c0_18, %c0_19, %c0_20, %c0_21], %28 {strides = array<i32>} : memref<1x1x2x24xf32, #tpu.memory_space<vmem>>, vector<1x1x2x24xf32>,
    return
  }
  func.func @transform_0(%arg0: i32, %arg1: i32) -> (i32, i32, i32, i32) {
    %c0_i32 = arith.constant 0 : i32
    %c0_i32_0 = arith.constant 0 : i32
    %c0_i32_1 = arith.constant 0 : i32
    return %arg0, %arg1, %c0_i32, %c0_i32_0 : i32, i32, i32, i32
  }
  func.func @transform_1(%arg0: i32, %arg1: i32) -> (i32, i32, i32) {
    %c0_i32 = arith.constant 0 : i32
    %c0_i32_0 = arith.constant 0 : i32
    %c0_i32_1 = arith.constant 0 : i32
    %c0_i32_2 = arith.constant 0 : i32
    return %c0_i32, %c0_i32_0, %c0_i32_1 : i32, i32, i32
  }
  func.func @transform_2(%arg0: i32, %arg1: i32) -> (i32, i32) {
    %c0_i32 = arith.constant 0 : i32
    %c0_i32_0 = arith.constant 0 : i32
    %c0_i32_1 = arith.constant 0 : i32
    return %c0_i32, %c0_i32_0 : i32, i32
  }
  func.func @transform_3(%arg0: i32, %arg1: i32) -> (i32, i32, i32, i32) {
    %c0_i32 = arith.constant 0 : i32
    %c0_i32_0 = arith.constant 0 : i32
    %c0_i32_1 = arith.constant 0 : i32
    return %arg0, %arg1, %c0_i32, %c0_i32_0 : i32, i32, i32, i32
  }
}

module attributes {stable_mosaic.version = 11 : i64} {
  func.func @_conv_apply_kernel(%arg0: i32, %arg1: i32, %arg2: memref<1x1x10x72xf32, #tpu.memory_space<vmem>>, %arg3: memref<3x72x128xf32, #tpu.memory_space<vmem>>, %arg4: memref<1x128xf32, #tpu.memory_space<vmem>>, %arg5: memref<1x1x8x128xf32, #tpu.memory_space<vmem>>) attributes {dimension_semantics = [#tpu.dimension_semantics<parallel>, #tpu.dimension_semantics<parallel>], iteration_bounds = array<i64: 2, 2>, scalar_prefetch = 0 : i64, scratch_operands = 0 : i64, tpu.core_type = #tpu.core_type<tc>, window_params = [{transform_indices = @transform_0, window_bounds = array<i64: 1, 1, 10, 72>}, {pipeline_mode = #tpu.pipeline_mode<synchronous>, transform_indices = @transform_1, window_bounds = array<i64: 3, 72, 128>}, {pipeline_mode = #tpu.pipeline_mode<synchronous>, transform_indices = @transform_2, window_bounds = array<i64: 1, 128>}, {transform_indices = @transform_3, window_bounds = array<i64: 1, 1, 8, 128>}]} {
    %c0 = arith.constant 0 : index
    %c0_0 = arith.constant 0 : index
    %c0_1 = arith.constant 0 : index
    %c0_2 = arith.constant 0 : index
    %0 = vector.load %arg2[%c0, %c0_0, %c0_1, %c0_2] : memref<1x1x10x72xf32, #tpu.memory_space<vmem>>, vector<1x1x10x72xf32>
    %1 = vector.shape_cast %0 : vector<1x1x10x72xf32> to vector<10x72xf32>
    %cst = arith.constant 0.000000e+00 : f32
    %2 = vector.broadcast %cst : f32 to vector<8x128xf32>
    %3 = vector.extract_strided_slice %1 {offsets = [0, 0], sizes = [8, 72], strides = [1, 1]} : vector<10x72xf32> to vector<8x72xf32>
    %c0_3 = arith.constant 0 : index
    %c0_4 = arith.constant 0 : index
    %c0_5 = arith.constant 0 : index
    %4 = vector.load %arg3[%c0_3, %c0_4, %c0_5] : memref<3x72x128xf32, #tpu.memory_space<vmem>>, vector<1x72x128xf32>
    %5 = vector.shape_cast %4 : vector<1x72x128xf32> to vector<72x128xf32>
    %cst_6 = arith.constant dense<0.000000e+00> : vector<8x128xf32>
    %6 = tpu.matmul %3, %5, %cst_6 {dimension_numbers = #tpu.dot_dimension_numbers<[1], [0], [0], [1], [0, 0, 1, 1], [], []>} : vector<8x72xf32>, vector<72x128xf32>, vector<8x128xf32> -> vector<8x128xf32>
    %7 = arith.addf %2, %6 : vector<8x128xf32>
    %8 = vector.extract_strided_slice %1 {offsets = [1, 0], sizes = [8, 72], strides = [1, 1]} : vector<10x72xf32> to vector<8x72xf32>
    %c1 = arith.constant 1 : index
    %c0_7 = arith.constant 0 : index
    %c0_8 = arith.constant 0 : index
    %9 = vector.load %arg3[%c1, %c0_7, %c0_8] : memref<3x72x128xf32, #tpu.memory_space<vmem>>, vector<1x72x128xf32>
    %10 = vector.shape_cast %9 : vector<1x72x128xf32> to vector<72x128xf32>
    %cst_9 = arith.constant dense<0.000000e+00> : vector<8x128xf32>
    %11 = tpu.matmul %8, %10, %cst_9 {dimension_numbers = #tpu.dot_dimension_numbers<[1], [0], [0], [1], [0, 0, 1, 1], [], []>} : vector<8x72xf32>, vector<72x128xf32>, vector<8x128xf32> -> vector<8x128xf32>
    %12 = arith.addf %7, %11 : vector<8x128xf32>
    %13 = vector.extract_strided_slice %1 {offsets = [2, 0], sizes = [8, 72], strides = [1, 1]} : vector<10x72xf32> to vector<8x72xf32>
    %c2 = arith.constant 2 : index
    %c0_10 = arith.constant 0 : index
    %c0_11 = arith.constant 0 : index
    %14 = vector.load %arg3[%c2, %c0_10, %c0_11] : memref<3x72x128xf32, #tpu.memory_space<vmem>>, vector<1x72x128xf32>
    %15 = vector.shape_cast %14 : vector<1x72x128xf32> to vector<72x128xf32>
    %cst_12 = arith.constant dense<0.000000e+00> : vector<8x128xf32>
    %16 = tpu.matmul %13, %15, %cst_12 {dimension_numbers = #tpu.dot_dimension_numbers<[1], [0], [0], [1], [0, 0, 1, 1], [], []>} : vector<8x72xf32>, vector<72x128xf32>, vector<8x128xf32> -> vector<8x128xf32>
    %17 = arith.addf %12, %16 : vector<8x128xf32>
    %c0_13 = arith.constant 0 : index
    %c0_14 = arith.constant 0 : index
    %18 = vector.load %arg4[%c0_13, %c0_14] : memref<1x128xf32, #tpu.memory_space<vmem>>, vector<1x128xf32>
    %19 = vector.broadcast %18 : vector<1x128xf32> to vector<8x128xf32>
    %20 = arith.addf %17, %19 : vector<8x128xf32>
    %c0_15 = arith.constant 0 : index
    %c0_16 = arith.constant 0 : index
    %c0_17 = arith.constant 0 : index
    %c0_18 = arith.constant 0 : index
    %21 = vector.load %arg5[%c0_15, %c0_16, %c0_17, %c0_18] : memref<1x1x8x128xf32, #tpu.memory_space<vmem>>, vector<1x1x8x128xf32>
    %22 = vector.shape_cast %21 : vector<1x1x8x128xf32> to vector<8x128xf32>
    %23 = vector.shape_cast %20 : vector<8x128xf32> to vector<1x1x8x128xf32>
    tpu.vector_store %arg5[%c0_15, %c0_16, %c0_17, %c0_18], %23 {strides = array<i32>} : memref<1x1x8x128xf32, #tpu.memory_space<vmem>>, vector<1x1x8x128xf32>,
    return
  }
  func.func @transform_0(%arg0: i32, %arg1: i32) -> (i32, i32, i32, i32) {
    %c0_i32 = arith.constant 0 : i32
    %c0_i32_0 = arith.constant 0 : i32
    %c0_i32_1 = arith.constant 0 : i32
    return %arg0, %arg1, %c0_i32, %c0_i32_0 : i32, i32, i32, i32
  }
  func.func @transform_1(%arg0: i32, %arg1: i32) -> (i32, i32, i32) {
    %c0_i32 = arith.constant 0 : i32
    %c0_i32_0 = arith.constant 0 : i32
    %c0_i32_1 = arith.constant 0 : i32
    %c0_i32_2 = arith.constant 0 : i32
    return %c0_i32, %c0_i32_0, %c0_i32_1 : i32, i32, i32
  }
  func.func @transform_2(%arg0: i32, %arg1: i32) -> (i32, i32) {
    %c0_i32 = arith.constant 0 : i32
    %c0_i32_0 = arith.constant 0 : i32
    %c0_i32_1 = arith.constant 0 : i32
    return %c0_i32, %c0_i32_0 : i32, i32
  }
  func.func @transform_3(%arg0: i32, %arg1: i32) -> (i32, i32, i32, i32) {
    %c0_i32 = arith.constant 0 : i32
    %c0_i32_0 = arith.constant 0 : i32
    %c0_i32_1 = arith.constant 0 : i32
    return %arg0, %arg1, %c0_i32, %c0_i32_0 : i32, i32, i32, i32
  }
}

</mosaic_0001>

<llo_original>
// kernel: acblock_forward.2
$region0: #{acblock_forward.2}
  #allocation0 [shape = 'u32[]', space=smem, size = 0x4, offset = 0x4, fixed_abs, tag = 'smem constant byte address 0x4 - core index']
  #allocation1 [shape = 'u32[72,128]{1,0:T(1,128)}', space=vmem, size = 0x9000, scoped, tag = 'internal scratch']
  %s0 = inlined_call_operand.vmem [shape: f32[2,2,10,72], index: 0, kind: input, shape index: {}]
  %s1 = inlined_call_operand.vmem [shape: f32[3,72,384], index: 1, kind: input, shape index: {}]
  %s2 = inlined_call_operand.vmem [shape: f32[384,24], index: 2, kind: input, shape index: {}]
  %s3 = inlined_call_operand.vmem [shape: f32[2,2,2,24], index: 3, kind: output, shape index: {}]
  %s4 = sld [smem:[#allocation0]]
  $region45: #{acblock_forward.2} parent=0
    _
  %s6 = ssub.s32 1, %s4
  %s7 = scalar_select 0, %s6, %s4
  loop: start=0, step=1, limit=6
  $region2: #{acblock_forward.2} parent=0 // loop_pre_header
    _
  $region3: #{acblock_forward.2} parent=0 // loop_header
    %s9 = sphi 0, %s13
    %p10 = scmp.ge.s32.totalorder %s9, 6
    %s16 = sphi 0, %s28
    %s17 = sphi 0, %s24
    %s18 = sphi 0, %s16
    %s19 = sphi 0, %s17
    %s20 = sphi 0, %s18
    %s21 = sphi 0, %s19
    %s33 = sphi 0, %s35
    %s36 = sphi 0, %s33
    %s37 = sphi 0, %s36
    %s53 = sphi 0, %s37
    %s57 = sphi 0, %s57
    %s59 = sphi 0, %s57
    %s60 = sphi 0, %s59
    %s74 = sphi 0, %s60
    %s78 = sphi 0, %s78
    %s80 = sphi 0, %s78
    %s81 = sphi 0, %s80
    %s95 = sphi 0, %s81
    %s103 = sphi 0, %s105
    %s106 = sphi 0, %s103
    %s107 = sphi 0, %s106
    %s123 = sphi 0, %s107
  $region4: #{acblock_forward.2} parent=0 // loop_header_branch
    %12 = sbr.rel (%p10) target = $region8
  $region5: #{acblock_forward.2} parent=0 // loop_body
    %s14 = ssub.s32 %s9, 1
    %s15 = ssub.s32 %s9, 2
    %s22 = sadd.s32 1, %s17
    %p23 = scmp.ge.s32.totalorder %s22, 2
    %s24 = scalar_select %p23, 0, %s22
    %s25 = sadd.s32 1, %s16
    %s26 = scalar_select %p23, %s25, %s16
    %p27 = scmp.ge.s32.totalorder %s26, 2
    %s28 = scalar_select %p27, 0, %s26
    %s29 = ssub.s32 %s16, %s28
    %s30 = ssub.s32 %s17, %s24
    %s31 = sor.u32 %s29, %s30
    %p32 = scmp.eq.s32.totalorder %s31, 0
    %s34 = sadd.s32 %s33, 1
    %s35 = scalar_select %p32, %s33, %s34
    %p38 = pneg %p32
    %p39 = scmp.eq.s32.totalorder %s9, 3
    %p40 = por %p38, %p39
    %p41 = scmp.ne.s32.totalorder %s33, %s36
    %p42 = scmp.eq.s32.totalorder %s9, 0
    %p43 = por %p41, %p42
    %p44 = scmp.ne.s32.totalorder %s33, %s36
    %p45 = scmp.eq.s32.totalorder %s14, 3
    %p46 = por %p44, %p45
    %p47 = scmp.ne.s32.totalorder %s36, %s37
    %p48 = scmp.eq.s32.totalorder %s14, 0
    %p49 = por %p47, %p48
    %p50 = scmp.ne.s32.totalorder %s36, %s37
    %p51 = scmp.eq.s32.totalorder %s15, 3
    %p52 = por %p50, %p51
    %p54 = scmp.ne.s32.totalorder %s37, %s53
    %p55 = scmp.eq.s32.totalorder %s15, 0
    %p56 = por %p54, %p55
    %s58 = sadd.s32 %s57, 1
    %p61 = scmp.eq.s32.totalorder %s9, 3
    %p62 = scmp.ne.s32.totalorder %s57, %s59
    %p63 = scmp.eq.s32.totalorder %s9, 0
    %p64 = por %p62, %p63
    %p65 = scmp.ne.s32.totalorder %s57, %s59
    %p66 = scmp.eq.s32.totalorder %s14, 3
    %p67 = por %p65, %p66
    %p68 = scmp.ne.s32.totalorder %s59, %s60
    %p69 = scmp.eq.s32.totalorder %s14, 0
    %p70 = por %p68, %p69
    %p71 = scmp.ne.s32.totalorder %s59, %s60
    %p72 = scmp.eq.s32.totalorder %s15, 3
    %p73 = por %p71, %p72
    %p75 = scmp.ne.s32.totalorder %s60, %s74
    %p76 = scmp.eq.s32.totalorder %s15, 0
    %p77 = por %p75, %p76
    %s79 = sadd.s32 %s78, 1
    %p82 = scmp.eq.s32.totalorder %s9, 3
    %p83 = scmp.ne.s32.totalorder %s78, %s80
    %p84 = scmp.eq.s32.totalorder %s9, 0
    %p85 = por %p83, %p84
    %p86 = scmp.ne.s32.totalorder %s78, %s80
    %p87 = scmp.eq.s32.totalorder %s14, 3
    %p88 = por %p86, %p87
    %p89 = scmp.ne.s32.totalorder %s80, %s81
    %p90 = scmp.eq.s32.totalorder %s14, 0
    %p91 = por %p89, %p90
    %p92 = scmp.ne.s32.totalorder %s80, %s81
    %p93 = scmp.eq.s32.totalorder %s15, 3
    %p94 = por %p92, %p93
    %p96 = scmp.ne.s32.totalorder %s81, %s95
    %p97 = scmp.eq.s32.totalorder %s15, 0
    %p98 = por %p96, %p97
    %s99 = ssub.s32 %s16, %s28
    %s100 = ssub.s32 %s17, %s24
    %s101 = sor.u32 %s99, %s100
    %p102 = scmp.eq.s32.totalorder %s101, 0
    %s104 = sadd.s32 %s103, 1
    %s105 = scalar_select %p102, %s103, %s104
    %p108 = pneg %p102
    %p109 = scmp.eq.s32.totalorder %s9, 3
    %p110 = por %p108, %p109
    %p111 = scmp.ne.s32.totalorder %s103, %s106
    %p112 = scmp.eq.s32.totalorder %s9, 0
    %p113 = por %p111, %p112
    %p114 = scmp.ne.s32.totalorder %s103, %s106
    %p115 = scmp.eq.s32.totalorder %s14, 3
    %p116 = por %p114, %p115
    %p117 = scmp.ne.s32.totalorder %s106, %s107
    %p118 = scmp.eq.s32.totalorder %s14, 0
    %p119 = por %p117, %p118
    %p120 = scmp.ne.s32.totalorder %s106, %s107
    %p121 = scmp.eq.s32.totalorder %s15, 3
    %p122 = por %p120, %p121
    %p124 = scmp.ne.s32.totalorder %s107, %s123
    %p125 = scmp.eq.s32.totalorder %s15, 0
    %p126 = por %p124, %p125
    %p127 = scmp.le.s32.totalorder 1, %s9
    %p128 = scmp.lt.s32.totalorder %s9, 5
    %p129 = pnand %p127, %p128
    %p130 = pneg %p129
    // Predicated region
    $region9: #{acblock_forward.2} parent=5 // pred_check
      _
    $region10: #{acblock_forward.2} parent=5 // pred_check_branch
      %132 = sbr.rel (%p129) target = $region12
    $region11: #{acblock_forward.2} parent=5 // pred_region
      %s133 = ssub.s32 %s9, 1
      // Predicated region
      $region13: #{acblock_forward.2} parent=11 // pred_check
        %p134 = pneg %p70
      $region14: #{acblock_forward.2} parent=11 // pred_check_branch
        %136 = sbr.rel (%p134) target = $region16
      $region15: #{acblock_forward.2} parent=11 // pred_region
        _
      $region16: #{acblock_forward.2} parent=11 // pred_fallthru
        _
      // Predicated region
      $region17: #{acblock_forward.2} parent=11 // pred_check
        %p137 = pneg %p91
      $region18: #{acblock_forward.2} parent=11 // pred_check_branch
        %139 = sbr.rel (%p137) target = $region20
      $region19: #{acblock_forward.2} parent=11 // pred_region
        _
      $region20: #{acblock_forward.2} parent=11 // pred_fallthru
        _
    $region12: #{acblock_forward.2} parent=5 // pred_fallthru
      _
    %p140 = scmp.lt.s32.totalorder %s9, 4
    // Predicated region
    $region21: #{acblock_forward.2} parent=5 // pred_check
      %p141 = pneg %p140
    $region22: #{acblock_forward.2} parent=5 // pred_check_branch
      %143 = sbr.rel (%p141) target = $region24
    $region23: #{acblock_forward.2} parent=5 // pred_region
      // Predicated region
      $region25: #{acblock_forward.2} parent=23 // pred_check
        %p144 = pneg %p43
      $region26: #{acblock_forward.2} parent=23 // pred_check_branch
        %146 = sbr.rel (%p144) target = $region28
      $region27: #{acblock_forward.2} parent=23 // pred_region
        %p147 = scmp.lt.s32.totalorder %s16, 1
        %s148 = scalar_select %p147, %s16, 1
        %p149 = scmp.lt.s32.totalorder %s17, 1
        %s150 = scalar_select %p149, %s17, 1
        %s151 = smul.addr %s150, 2
        %s152 = smul.addr %s148, 4
        %s153 = sadd.s32 %s151, %s152
        %s154 = smul.addr %s153, 8
        %s155 = scalar_lea.vmem %s0, %s154
      $region28: #{acblock_forward.2} parent=23 // pred_fallthru
        _
    $region24: #{acblock_forward.2} parent=5 // pred_fallthru
      _
    %p156 = scmp.le.s32.totalorder 1, %s9
    %p157 = scmp.lt.s32.totalorder %s9, 5
    %p158 = pnand %p156, %p157
    %p159 = pneg %p158
    // Predicated region
    $region29: #{acblock_forward.2} parent=5 // pred_check
      _
    $region30: #{acblock_forward.2} parent=5 // pred_check_branch
      %161 = sbr.rel (%p158) target = $region32
    $region31: #{acblock_forward.2} parent=5 // pred_region
      %s162 = ssub.s32 %s9, 1
      %p163 = scmp.lt.s32.totalorder %s18, 1
      %s164 = scalar_select %p163, %s18, 1
      %p165 = scmp.lt.s32.totalorder %s19, 1
      %s166 = scalar_select %p165, %s19, 1
      %s167 = smul.addr %s166, 2
      %s168 = smul.addr %s164, 4
      %s169 = sadd.s32 %s167, %s168
      %s170 = smul.addr %s169, 8
      %s171 = scalar_lea.vmem %s0, %s170
      %p172 = pneg %p49
      %p173 = pneg %p46
      %p174 = pneg %p70
      %p175 = pneg %p67
      %p176 = pneg %p91
      %p177 = pneg %p88
      %p178 = pneg %p119
      %p179 = pneg %p116
      %p180 = scmp.lt.s32.totalorder %s18, 1
      %s181 = scalar_select %p180, %s18, 1
      %p182 = scmp.lt.s32.totalorder %s19, 1
      %s183 = scalar_select %p182, %s19, 1
      %s184 = smul.addr %s181, 2
      %s185 = sadd.s32 %s183, %s184
      %s186 = smul.addr %s185, 2
      %s187 = scalar_lea.vmem %s3, %s186
      %p188 = scmp.lt.s32.totalorder %s18, 1
      %s189 = scalar_select %p188, %s18, 1
      %p190 = scmp.lt.s32.totalorder %s19, 1
      %s191 = scalar_select %p190, %s19, 1
      %s192 = smul.addr %s191, 2
      %s193 = smul.addr %s189, 4
      %s194 = sadd.s32 %s192, %s193
      %s195 = smul.addr %s194, 8
      %s196 = scalar_lea.vmem %s0, %s195
      %p197 = scmp.lt.s32.totalorder %s18, 1
      %s198 = scalar_select %p197, %s18, 1
      %p199 = scmp.lt.s32.totalorder %s19, 1
      %s200 = scalar_select %p199, %s19, 1
      %s201 = smul.addr %s198, 2
      %s202 = sadd.s32 %s200, %s201
      %s203 = smul.addr %s202, 2
      %s204 = scalar_lea.vmem %s3, %s203
      %v205 = vld [vmem:[%s196] sm:$0xff]
      %v206 = vld [vmem:[%s196 + $0x8] sm:$0x3]
      %v207 = vld [vmem:[%s1] sm:$0xff]
      %v208 = vld [vmem:[%s1 + $0x8] sm:$0xff]
      %v209 = vld [vmem:[%s1 + $0x10] sm:$0xff]
      %v210 = vld [vmem:[%s1 + $0x18] sm:$0xff]
      %v211 = vld [vmem:[%s1 + $0x20] sm:$0xff]
      %v212 = vld [vmem:[%s1 + $0x28] sm:$0xff]
      %v213 = vld [vmem:[%s1 + $0x30] sm:$0xff]
      %v214 = vld [vmem:[%s1 + $0x38] sm:$0xff]
      %v215 = vld [vmem:[%s1 + $0x40] sm:$0xff]
      %v216 = vld [vmem:[%s1 + $0x48] sm:$0xff]
      %v217 = vld [vmem:[%s1 + $0x50] sm:$0xff]
      %v218 = vld [vmem:[%s1 + $0x58] sm:$0xff]
      %v219 = vld [vmem:[%s1 + $0x60] sm:$0xff]
      %v220 = vld [vmem:[%s1 + $0x68] sm:$0xff]
      %v221 = vld [vmem:[%s1 + $0x70] sm:$0xff]
      %v222 = vld [vmem:[%s1 + $0x78] sm:$0xff]
      %v223 = vld [vmem:[%s1 + $0x80] sm:$0xff]
      %v224 = vld [vmem:[%s1 + $0x88] sm:$0xff]
      %v225 = vld [vmem:[%s1 + $0x90] sm:$0xff]
      %v226 = vld [vmem:[%s1 + $0x98] sm:$0xff]
      %v227 = vld [vmem:[%s1 + $0xa0] sm:$0xff]
      %v228 = vld [vmem:[%s1 + $0xa8] sm:$0xff]
      %v229 = vld [vmem:[%s1 + $0xb0] sm:$0xff]
      %v230 = vld [vmem:[%s1 + $0xb8] sm:$0xff]
      %v231 = vld [vmem:[%s1 + $0xc0] sm:$0xff]
      %v232 = vld [vmem:[%s1 + $0xc8] sm:$0xff]
      %v233 = vld [vmem:[%s1 + $0xd0] sm:$0xff]
      %s234 = scalar_lea.vmem %s1, 216
      %v235 = vld [vmem:[%s234] sm:$0xff]
      %v236 = vld [vmem:[%s234 + $0x8] sm:$0xff]
      %v237 = vld [vmem:[%s234 + $0x10] sm:$0xff]
      %v238 = vld [vmem:[%s234 + $0x18] sm:$0xff]
      %v239 = vld [vmem:[%s234 + $0x20] sm:$0xff]
      %v240 = vld [vmem:[%s234 + $0x28] sm:$0xff]
      %v241 = vld [vmem:[%s234 + $0x30] sm:$0xff]
      %v242 = vld [vmem:[%s234 + $0x38] sm:$0xff]
      %v243 = vld [vmem:[%s234 + $0x40] sm:$0xff]
      %v244 = vld [vmem:[%s234 + $0x48] sm:$0xff]
      %v245 = vld [vmem:[%s234 + $0x50] sm:$0xff]
      %v246 = vld [vmem:[%s234 + $0x58] sm:$0xff]
      %v247 = vld [vmem:[%s234 + $0x60] sm:$0xff]
      %v248 = vld [vmem:[%s234 + $0x68] sm:$0xff]
      %v249 = vld [vmem:[%s234 + $0x70] sm:$0xff]
      %v250 = vld [vmem:[%s234 + $0x78] sm:$0xff]
      %v251 = vld [vmem:[%s234 + $0x80] sm:$0xff]
      %v252 = vld [vmem:[%s234 + $0x88] sm:$0xff]
      %v253 = vld [vmem:[%s234 + $0x90] sm:$0xff]
      %v254 = vld [vmem:[%s234 + $0x98] sm:$0xff]
      %v255 = vld [vmem:[%s234 + $0xa0] sm:$0xff]
      %v256 = vld [vmem:[%s234 + $0xa8] sm:$0xff]
      %v257 = vld [vmem:[%s234 + $0xb0] sm:$0xff]
      %v258 = vld [vmem:[%s234 + $0xb8] sm:$0xff]
      %v259 = vld [vmem:[%s234 + $0xc0] sm:$0xff]
      %v260 = vld [vmem:[%s234 + $0xc8] sm:$0xff]
      %v261 = vld [vmem:[%s234 + $0xd0] sm:$0xff]
      %vm264 = vcmask 1046528
      %v265 = vrot.slane %v205, 1
      %v266 = vrot.slane %v206, 1
      %v267 = vsel %vm264, %v265, %v266
      %vm268 = vcmask 588800
      %v269 = vsel %vm268, %v267, 0
      %271 = vmatpush.msra.mxu0 0.0
      %272 = vmatpush.msra.mxu0 0.0
      %273 = vmatpush.msra.mxu0 0.0
      %274 = vmatpush.msra.mxu0 0.0
      %275 = vmatpush.msra.mxu0 0.0
      %276 = vmatpush.msra.mxu0 0.0
      %277 = vmatpush.msra.mxu0 0.0
      %278 = vmatpush.msra.mxu0 %v259
      %279 = vmatpush.msra.mxu0 %v256
      %280 = vmatpush.msra.mxu0 %v253
      %281 = vmatpush.msra.mxu0 %v250
      %282 = vmatpush.msra.mxu0 %v247
      %283 = vmatpush.msra.mxu0 %v244
      %284 = vmatpush.msra.mxu0 %v241
      %285 = vmatpush.msra.mxu0 %v238
      %286 = vmatpush.msra.mxu0 %v235
      %287 = vmatmul.f32.gmra.mxu0 %v269
      %v288 = vpop.f32.mrf.mxu0
      %v289 = vadd.f32 0.0, %v288
      %290 = vdwg.mxu0
      %291 = vmatpush.msra.mxu0 0.0
      %292 = vmatpush.msra.mxu0 0.0
      %293 = vmatpush.msra.mxu0 0.0
      %294 = vmatpush.msra.mxu0 0.0
      %295 = vmatpush.msra.mxu0 0.0
      %296 = vmatpush.msra.mxu0 0.0
      %297 = vmatpush.msra.mxu0 0.0
      %298 = vmatpush.msra.mxu0 %v260
      %299 = vmatpush.msra.mxu0 %v257
      %300 = vmatpush.msra.mxu0 %v254
      %301 = vmatpush.msra.mxu0 %v251
      %302 = vmatpush.msra.mxu0 %v248
      %303 = vmatpush.msra.mxu0 %v245
      %304 = vmatpush.msra.mxu0 %v242
      %305 = vmatpush.msra.mxu0 %v239
      %306 = vmatpush.msra.mxu0 %v236
      %307 = vmatmul.f32.gmra.mxu0 %v269
      %v308 = vpop.f32.mrf.mxu0
      %v309 = vadd.f32 0.0, %v308
      %310 = vdwg.mxu0
      %311 = vmatpush.msra.mxu0 0.0
      %312 = vmatpush.msra.mxu0 0.0
      %313 = vmatpush.msra.mxu0 0.0
      %314 = vmatpush.msra.mxu0 0.0
      %315 = vmatpush.msra.mxu0 0.0
      %316 = vmatpush.msra.mxu0 0.0
      %317 = vmatpush.msra.mxu0 0.0
      %318 = vmatpush.msra.mxu0 %v261
      %319 = vmatpush.msra.mxu0 %v258
      %320 = vmatpush.msra.mxu0 %v255
      %321 = vmatpush.msra.mxu0 %v252
      %322 = vmatpush.msra.mxu0 %v249
      %323 = vmatpush.msra.mxu0 %v246
      %324 = vmatpush.msra.mxu0 %v243
      %325 = vmatpush.msra.mxu0 %v240
      %326 = vmatpush.msra.mxu0 %v237
      %327 = vmatmul.f32.gmra.mxu0 %v269
      %v328 = vpop.f32.mrf.mxu0
      %v329 = vadd.f32 0.0, %v328
      %330 = vdwg.mxu0
      %v331 = vsel %vm268, %v205, 0
      %333 = vmatpush.msra.mxu0 0.0
      %334 = vmatpush.msra.mxu0 0.0
      %335 = vmatpush.msra.mxu0 0.0
      %336 = vmatpush.msra.mxu0 0.0
      %337 = vmatpush.msra.mxu0 0.0
      %338 = vmatpush.msra.mxu0 0.0
      %339 = vmatpush.msra.mxu0 0.0
      %340 = vmatpush.msra.mxu0 %v231
      %341 = vmatpush.msra.mxu0 %v228
      %342 = vmatpush.msra.mxu0 %v225
      %343 = vmatpush.msra.mxu0 %v222
      %344 = vmatpush.msra.mxu0 %v219
      %345 = vmatpush.msra.mxu0 %v216
      %346 = vmatpush.msra.mxu0 %v213
      %347 = vmatpush.msra.mxu0 %v210
      %348 = vmatpush.msra.mxu0 %v207
      %349 = vmatmul.f32.gmra.mxu0 %v331
      %v350 = vpop.f32.mrf.mxu0
      %v351 = vadd.f32 %v289, %v350
      %352 = vdwg.mxu0
      %353 = vmatpush.msra.mxu0 0.0
      %354 = vmatpush.msra.mxu0 0.0
      %355 = vmatpush.msra.mxu0 0.0
      %356 = vmatpush.msra.mxu0 0.0
      %357 = vmatpush.msra.mxu0 0.0
      %358 = vmatpush.msra.mxu0 0.0
      %359 = vmatpush.msra.mxu0 0.0
      %360 = vmatpush.msra.mxu0 %v232
      %361 = vmatpush.msra.mxu0 %v229
      %362 = vmatpush.msra.mxu0 %v226
      %363 = vmatpush.msra.mxu0 %v223
      %364 = vmatpush.msra.mxu0 %v220
      %365 = vmatpush.msra.mxu0 %v217
      %366 = vmatpush.msra.mxu0 %v214
      %367 = vmatpush.msra.mxu0 %v211
      %368 = vmatpush.msra.mxu0 %v208
      %369 = vmatmul.f32.gmra.mxu0 %v331
      %v370 = vpop.f32.mrf.mxu0
      %v371 = vadd.f32 %v309, %v370
      %372 = vdwg.mxu0
      %373 = vmatpush.msra.mxu0 0.0
      %374 = vmatpush.msra.mxu0 0.0
      %375 = vmatpush.msra.mxu0 0.0
      %376 = vmatpush.msra.mxu0 0.0
      %377 = vmatpush.msra.mxu0 0.0
      %378 = vmatpush.msra.mxu0 0.0
      %379 = vmatpush.msra.mxu0 0.0
      %380 = vmatpush.msra.mxu0 %v233
      %381 = vmatpush.msra.mxu0 %v230
      %382 = vmatpush.msra.mxu0 %v227
      %383 = vmatpush.msra.mxu0 %v224
      %384 = vmatpush.msra.mxu0 %v221
      %385 = vmatpush.msra.mxu0 %v218
      %386 = vmatpush.msra.mxu0 %v215
      %387 = vmatpush.msra.mxu0 %v212
      %388 = vmatpush.msra.mxu0 %v209
      %389 = vmatmul.f32.gmra.mxu0 %v331
      %v390 = vpop.f32.mrf.mxu0
      %v391 = vadd.f32 %v329, %v390
      %392 = vdwg.mxu0
      %s393 = scalar_lea.vmem %s1, 432
      %v394 = vld [vmem:[%s393] sm:$0xff]
      %v395 = vld [vmem:[%s393 + $0x8] sm:$0xff]
      %v396 = vld [vmem:[%s393 + $0x10] sm:$0xff]
      %v397 = vld [vmem:[%s393 + $0x18] sm:$0xff]
      %v398 = vld [vmem:[%s393 + $0x20] sm:$0xff]
      %v399 = vld [vmem:[%s393 + $0x28] sm:$0xff]
      %v400 = vld [vmem:[%s393 + $0x30] sm:$0xff]
      %v401 = vld [vmem:[%s393 + $0x38] sm:$0xff]
      %v402 = vld [vmem:[%s393 + $0x40] sm:$0xff]
      %v403 = vld [vmem:[%s393 + $0x48] sm:$0xff]
      %v404 = vld [vmem:[%s393 + $0x50] sm:$0xff]
      %v405 = vld [vmem:[%s393 + $0x58] sm:$0xff]
      %v406 = vld [vmem:[%s393 + $0x60] sm:$0xff]
      %v407 = vld [vmem:[%s393 + $0x68] sm:$0xff]
      %v408 = vld [vmem:[%s393 + $0x70] sm:$0xff]
      %v409 = vld [vmem:[%s393 + $0x78] sm:$0xff]
      %v410 = vld [vmem:[%s393 + $0x80] sm:$0xff]
      %v411 = vld [vmem:[%s393 + $0x88] sm:$0xff]
      %v412 = vld [vmem:[%s393 + $0x90] sm:$0xff]
      %v413 = vld [vmem:[%s393 + $0x98] sm:$0xff]
      %v414 = vld [vmem:[%s393 + $0xa0] sm:$0xff]
      %v415 = vld [vmem:[%s393 + $0xa8] sm:$0xff]
      %v416 = vld [vmem:[%s393 + $0xb0] sm:$0xff]
      %v417 = vld [vmem:[%s393 + $0xb8] sm:$0xff]
      %v418 = vld [vmem:[%s393 + $0xc0] sm:$0xff]
      %v419 = vld [vmem:[%s393 + $0xc8] sm:$0xff]
      %v420 = vld [vmem:[%s393 + $0xd0] sm:$0xff]
      %vm421 = vcmask 1045504
      %v422 = vrot.slane %v205, 2
      %v423 = vrot.slane %v206, 2
      %v424 = vsel %vm421, %v422, %v423
      %v425 = vsel %vm268, %v424, 0
      %427 = vmatpush.msra.mxu0 0.0
      %428 = vmatpush.msra.mxu0 0.0
      %429 = vmatpush.msra.mxu0 0.0
      %430 = vmatpush.msra.mxu0 0.0
      %431 = vmatpush.msra.mxu0 0.0
      %432 = vmatpush.msra.mxu0 0.0
      %433 = vmatpush.msra.mxu0 0.0
      %434 = vmatpush.msra.mxu0 %v418
      %435 = vmatpush.msra.mxu0 %v415
      %436 = vmatpush.msra.mxu0 %v412
      %437 = vmatpush.msra.mxu0 %v409
      %438 = vmatpush.msra.mxu0 %v406
      %439 = vmatpush.msra.mxu0 %v403
      %440 = vmatpush.msra.mxu0 %v400
      %441 = vmatpush.msra.mxu0 %v397
      %442 = vmatpush.msra.mxu0 %v394
      %443 = vmatmul.f32.gmra.mxu0 %v425
      %v444 = vpop.f32.mrf.mxu0
      %v445 = vadd.f32 0.0, %v444
      %446 = vdwg.mxu0
      %447 = vmatpush.msra.mxu0 0.0
      %448 = vmatpush.msra.mxu0 0.0
      %449 = vmatpush.msra.mxu0 0.0
      %450 = vmatpush.msra.mxu0 0.0
      %451 = vmatpush.msra.mxu0 0.0
      %452 = vmatpush.msra.mxu0 0.0
      %453 = vmatpush.msra.mxu0 0.0
      %454 = vmatpush.msra.mxu0 %v419
      %455 = vmatpush.msra.mxu0 %v416
      %456 = vmatpush.msra.mxu0 %v413
      %457 = vmatpush.msra.mxu0 %v410
      %458 = vmatpush.msra.mxu0 %v407
      %459 = vmatpush.msra.mxu0 %v404
      %460 = vmatpush.msra.mxu0 %v401
      %461 = vmatpush.msra.mxu0 %v398
      %462 = vmatpush.msra.mxu0 %v395
      %463 = vmatmul.f32.gmra.mxu0 %v425
      %v464 = vpop.f32.mrf.mxu0
      %v465 = vadd.f32 0.0, %v464
      %466 = vdwg.mxu0
      %467 = vmatpush.msra.mxu0 0.0
      %468 = vmatpush.msra.mxu0 0.0
      %469 = vmatpush.msra.mxu0 0.0
      %470 = vmatpush.msra.mxu0 0.0
      %471 = vmatpush.msra.mxu0 0.0
      %472 = vmatpush.msra.mxu0 0.0
      %473 = vmatpush.msra.mxu0 0.0
      %474 = vmatpush.msra.mxu0 %v420
      %475 = vmatpush.msra.mxu0 %v417
      %476 = vmatpush.msra.mxu0 %v414
      %477 = vmatpush.msra.mxu0 %v411
      %478 = vmatpush.msra.mxu0 %v408
      %479 = vmatpush.msra.mxu0 %v405
      %480 = vmatpush.msra.mxu0 %v402
      %481 = vmatpush.msra.mxu0 %v399
      %482 = vmatpush.msra.mxu0 %v396
      %483 = vmatmul.f32.gmra.mxu0 %v425
      %v484 = vpop.f32.mrf.mxu0
      %v485 = vadd.f32 0.0, %v484
      %486 = vdwg.mxu0
      %v487 = vadd.f32 %v351, %v445
      %v488 = vadd.f32 %v371, %v465
      %v489 = vadd.f32 %v391, %v485
      %v490 = vrot.slane %v487, 4
      %v491 = vadd.f32 %v487, %v490
      %v492 = vrot.slane %v491, 2
      %v493 = vadd.f32 %v491, %v492
      %v494 = vrot.slane %v493, 1
      %v495 = vadd.f32 %v493, %v494
      %v496 = vrot.slane %v488, 4
      %v497 = vadd.f32 %v488, %v496
      %v498 = vrot.slane %v497, 2
      %v499 = vadd.f32 %v497, %v498
      %v500 = vrot.slane %v499, 1
      %v501 = vadd.f32 %v499, %v500
      %v502 = vrot.slane %v489, 4
      %v503 = vadd.f32 %v489, %v502
      %v504 = vrot.slane %v503, 2
      %v505 = vadd.f32 %v503, %v504
      %v506 = vrot.slane %v505, 1
      %v507 = vadd.f32 %v505, %v506
      %v508 = vmul.f32 %v487, %v487
      %v509 = vmul.f32 %v488, %v488
      %v510 = vmul.f32 %v489, %v489
      %v511 = vrot.slane %v508, 4
      %v512 = vadd.f32 %v508, %v511
      %v513 = vrot.slane %v512, 2
      %v514 = vadd.f32 %v512, %v513
      %v515 = vrot.slane %v514, 1
      %v516 = vadd.f32 %v514, %v515
      %v517 = vrot.slane %v509, 4
      %v518 = vadd.f32 %v509, %v517
      %v519 = vrot.slane %v518, 2
      %v520 = vadd.f32 %v518, %v519
      %v521 = vrot.slane %v520, 1
      %v522 = vadd.f32 %v520, %v521
      %v523 = vrot.slane %v510, 4
      %v524 = vadd.f32 %v510, %v523
      %v525 = vrot.slane %v524, 2
      %v526 = vadd.f32 %v524, %v525
      %v527 = vrot.slane %v526, 1
      %v528 = vadd.f32 %v526, %v527
      %vm529 = vcmask 1040384
      %v530 = vsel %vm529, %v495, %v516
      %v531 = vsel %vm529, %v501, %v522
      %v532 = vsel %vm529, %v507, %v528
      %v533 = vld [vmem:[%s2] sm:$0xff]
      %v534 = vld [vmem:[%s2 + $0x8] sm:$0xff]
      %v535 = vld [vmem:[%s2 + $0x10] sm:$0xff]
      %v536 = vld [vmem:[%s2 + $0x18] sm:$0xff]
      %v537 = vld [vmem:[%s2 + $0x20] sm:$0xff]
      %v538 = vld [vmem:[%s2 + $0x28] sm:$0xff]
      %v539 = vld [vmem:[%s2 + $0x30] sm:$0xff]
      %v540 = vld [vmem:[%s2 + $0x38] sm:$0xff]
      %v541 = vld [vmem:[%s2 + $0x40] sm:$0xff]
      %v542 = vld [vmem:[%s2 + $0x48] sm:$0xff]
      %v543 = vld [vmem:[%s2 + $0x50] sm:$0xff]
      %v544 = vld [vmem:[%s2 + $0x58] sm:$0xff]
      %v545 = vld [vmem:[%s2 + $0x60] sm:$0xff]
      %v546 = vld [vmem:[%s2 + $0x68] sm:$0xff]
      %v547 = vld [vmem:[%s2 + $0x70] sm:$0xff]
      %v548 = vld [vmem:[%s2 + $0x78] sm:$0xff]
      %v549 = vld [vmem:[%s2 + $0x80] sm:$0xff]
      %v550 = vld [vmem:[%s2 + $0x88] sm:$0xff]
      %v551 = vld [vmem:[%s2 + $0x90] sm:$0xff]
      %v552 = vld [vmem:[%s2 + $0x98] sm:$0xff]
      %v553 = vld [vmem:[%s2 + $0xa0] sm:$0xff]
      %v554 = vld [vmem:[%s2 + $0xa8] sm:$0xff]
      %v555 = vld [vmem:[%s2 + $0xb0] sm:$0xff]
      %v556 = vld [vmem:[%s2 + $0xb8] sm:$0xff]
      %v557 = vld [vmem:[%s2 + $0xc0] sm:$0xff]
      %v558 = vld [vmem:[%s2 + $0xc8] sm:$0xff]
      %v559 = vld [vmem:[%s2 + $0xd0] sm:$0xff]
      %v560 = vld [vmem:[%s2 + $0xd8] sm:$0xff]
      %v561 = vld [vmem:[%s2 + $0xe0] sm:$0xff]
      %v562 = vld [vmem:[%s2 + $0xe8] sm:$0xff]
      %v563 = vld [vmem:[%s2 + $0xf0] sm:$0xff]
      %v564 = vld [vmem:[%s2 + $0xf8] sm:$0xff]
      %v565 = vld [vmem:[%s2 + $0x100] sm:$0xff]
      %v566 = vld [vmem:[%s2 + $0x108] sm:$0xff]
      %v567 = vld [vmem:[%s2 + $0x110] sm:$0xff]
      %v568 = vld [vmem:[%s2 + $0x118] sm:$0xff]
      %v569 = vld [vmem:[%s2 + $0x120] sm:$0xff]
      %v570 = vld [vmem:[%s2 + $0x128] sm:$0xff]
      %v571 = vld [vmem:[%s2 + $0x130] sm:$0xff]
      %v572 = vld [vmem:[%s2 + $0x138] sm:$0xff]
      %v573 = vld [vmem:[%s2 + $0x140] sm:$0xff]
      %v574 = vld [vmem:[%s2 + $0x148] sm:$0xff]
      %v575 = vld [vmem:[%s2 + $0x150] sm:$0xff]
      %v576 = vld [vmem:[%s2 + $0x158] sm:$0xff]
      %v577 = vld [vmem:[%s2 + $0x160] sm:$0xff]
      %v578 = vld [vmem:[%s2 + $0x168] sm:$0xff]
      %v579 = vld [vmem:[%s2 + $0x170] sm:$0xff]
      %v580 = vld [vmem:[%s2 + $0x178] sm:$0xff]
      %581 = vmatpush.msra.mxu0 %v548
      %582 = vmatpush.msra.mxu0 %v547
      %583 = vmatpush.msra.mxu0 %v546
      %584 = vmatpush.msra.mxu0 %v545
      %585 = vmatpush.msra.mxu0 %v544
      %586 = vmatpush.msra.mxu0 %v543
      %587 = vmatpush.msra.mxu0 %v542
      %588 = vmatpush.msra.mxu0 %v541
      %589 = vmatpush.msra.mxu0 %v540
      %590 = vmatpush.msra.mxu0 %v539
      %591 = vmatpush.msra.mxu0 %v538
      %592 = vmatpush.msra.mxu0 %v537
      %593 = vmatpush.msra.mxu0 %v536
      %594 = vmatpush.msra.mxu0 %v535
      %595 = vmatpush.msra.mxu0 %v534
      %596 = vmatpush.msra.mxu0 %v533
      %597 = vmatmul.f32.gmra.mxu0 %v530
      %v598 = vpop.f32.mrf.mxu0
      %v599 = vadd.f32 0.0, %v598
      %600 = vdwg.mxu0
      %601 = vmatpush.msra.mxu0 %v564
      %602 = vmatpush.msra.mxu0 %v563
      %603 = vmatpush.msra.mxu0 %v562
      %604 = vmatpush.msra.mxu0 %v561
      %605 = vmatpush.msra.mxu0 %v560
      %606 = vmatpush.msra.mxu0 %v559
      %607 = vmatpush.msra.mxu0 %v558
      %608 = vmatpush.msra.mxu0 %v557
      %609 = vmatpush.msra.mxu0 %v556
      %610 = vmatpush.msra.mxu0 %v555
      %611 = vmatpush.msra.mxu0 %v554
      %612 = vmatpush.msra.mxu0 %v553
      %613 = vmatpush.msra.mxu0 %v552
      %614 = vmatpush.msra.mxu0 %v551
      %615 = vmatpush.msra.mxu0 %v550
      %616 = vmatpush.msra.mxu0 %v549
      %617 = vmatmul.f32.gmra.mxu0 %v531
      %v618 = vpop.f32.mrf.mxu0
      %v619 = vadd.f32 %v599, %v618
      %620 = vdwg.mxu0
      %621 = vmatpush.msra.mxu0 %v580
      %622 = vmatpush.msra.mxu0 %v579
      %623 = vmatpush.msra.mxu0 %v578
      %624 = vmatpush.msra.mxu0 %v577
      %625 = vmatpush.msra.mxu0 %v576
      %626 = vmatpush.msra.mxu0 %v575
      %627 = vmatpush.msra.mxu0 %v574
      %628 = vmatpush.msra.mxu0 %v573
      %629 = vmatpush.msra.mxu0 %v572
      %630 = vmatpush.msra.mxu0 %v571
      %631 = vmatpush.msra.mxu0 %v570
      %632 = vmatpush.msra.mxu0 %v569
      %633 = vmatpush.msra.mxu0 %v568
      %634 = vmatpush.msra.mxu0 %v567
      %635 = vmatpush.msra.mxu0 %v566
      %636 = vmatpush.msra.mxu0 %v565
      %637 = vmatmul.f32.gmra.mxu0 %v532
      %v638 = vpop.f32.mrf.mxu0
      %v639 = vadd.f32 %v619, %v638
      %640 = vdwg.mxu0
      %vm641 = vcmask 189440
      %642 = vst.msk [vmem:[%s204] sm:$0x3] %vm641, %v639
      %p643 = scmp.lt.s32.totalorder %s18, 1
      %s644 = scalar_select %p643, %s18, 1
      %p645 = scmp.lt.s32.totalorder %s19, 1
      %s646 = scalar_select %p645, %s19, 1
      %s647 = smul.addr %s644, 2
      %s648 = sadd.s32 %s646, %s647
      %s649 = smul.addr %s648, 2
      %s650 = scalar_lea.vmem %s3, %s649
      // Predicated region
      $region33: #{acblock_forward.2} parent=31 // pred_check
        %p651 = pneg %p116
      $region34: #{acblock_forward.2} parent=31 // pred_check_branch
        %653 = sbr.rel (%p651) target = $region36
      $region35: #{acblock_forward.2} parent=31 // pred_region
        _
      $region36: #{acblock_forward.2} parent=31 // pred_fallthru
        _
    $region32: #{acblock_forward.2} parent=5 // pred_fallthru
      _
    %p654 = scmp.le.s32.totalorder 2, %s9
    // Predicated region
    $region37: #{acblock_forward.2} parent=5 // pred_check
      %p655 = pneg %p654
    $region38: #{acblock_forward.2} parent=5 // pred_check_branch
      %657 = sbr.rel (%p655) target = $region40
    $region39: #{acblock_forward.2} parent=5 // pred_region
      %s658 = ssub.s32 %s9, 2
      // Predicated region
      $region41: #{acblock_forward.2} parent=39 // pred_check
        %p659 = pneg %p122
      $region42: #{acblock_forward.2} parent=39 // pred_check_branch
        %661 = sbr.rel (%p659) target = $region44
      $region43: #{acblock_forward.2} parent=39 // pred_region
        %p662 = scmp.lt.s32.totalorder %s20, 1
        %s663 = scalar_select %p662, %s20, 1
        %p664 = scmp.lt.s32.totalorder %s21, 1
        %s665 = scalar_select %p664, %s21, 1
        %s666 = smul.addr %s663, 2
        %s667 = sadd.s32 %s665, %s666
        %s668 = smul.addr %s667, 2
        %s669 = scalar_lea.vmem %s3, %s668
      $region44: #{acblock_forward.2} parent=39 // pred_fallthru
        _
    $region40: #{acblock_forward.2} parent=5 // pred_fallthru
      _
  $region6: #{acblock_forward.2} parent=0 // loop_footer
    %s13 = sadd.s32 1, %s9
  $region7: #{acblock_forward.2} parent=0 // loop_footer_branch
    %8 = sbr.rel target = $region3
  $region8: #{acblock_forward.2} parent=0 // loop_exit
    _

// kernel: tile.18
$region0: #{tile.18}
  #allocation0 [shape = 's32[1]{0}', space=sflag, size = 0x4, scoped, tag = 'scoped memory for tile.18']
  %s0 = inlined_call_operand.vmem [shape: f32[8], index: 0, kind: input, shape index: {}]
  %s1 = inlined_call_operand.vmem [shape: f32[16,8], index: 1, kind: output, shape index: {}]
  // Predicated region
  $region2: #{tile.18} parent=0 // pred_check
    _
  $region3: #{tile.18} parent=0 // pred_check_branch
    %3 = sbr.rel (0) target = $region5
  $region4: #{tile.18} parent=0 // pred_region
    _
  $region5: #{tile.18} parent=0 // pred_fallthru
    _
  %v4 = vld [vmem:[%s0] ss:$0 sm:$0xff]
  %5 = vst [vmem:[%s1] sm:$0xff] %v4
  %s6 = scalar_lea.vmem %s1, 8
  %7 = vst [vmem:[%s6] sm:$0xff] %v4

// kernel: tile.19
$region0: #{tile.19}
  %s0 = inlined_call_operand.vmem [shape: f32[16,8], index: 0, kind: input, shape index: {}]
  %s1 = inlined_call_operand.vmem [shape: f32[1,128], index: 1, kind: output, shape index: {}]
  $region1: #{tile.19} parent=0
    #allocation0 [shape = 'u8[4096]{0}', space=vmem, size = 0x1000, scoped, tag = 'scoped mem for output reshape']
    %v2 = vld [vmem:[%s0] sm:$0x1]
    %vm3 = vcmask 64512
    %4 = vst.msk [vmem:[#allocation0] sm:$0x1] %vm3, %v2
    %s5 = scalar_lea.vmem %s0, 15
    %v6 = vld [vmem:[%s5] sm:$0x1]
    %7 = vrot.lane.b32.xlu0 %v6, 120
    %v8 = vpop.permute.xlu0 %7
    %vm9 = vcmask 1048512
    %10 = vst.msk [vmem:[#allocation0] sm:$0x1] %vm9, %v8
    %s11 = scalar_lea.vmem %s0, 14
    %v12 = vld [vmem:[%s11] sm:$0x1]
    %13 = vrot.lane.b32.xlu0 %v12, 112
    %v14 = vpop.permute.xlu0 %13
    %vm15 = vcmask 982912
    %16 = vst.msk [vmem:[#allocation0] sm:$0x1] %vm15, %v14
    %s17 = scalar_lea.vmem %s0, 13
    %v18 = vld [vmem:[%s17] sm:$0x1]
    %19 = vrot.lane.b32.xlu0 %v18, 104
    %v20 = vpop.permute.xlu0 %19
    %vm21 = vcmask 917312
    %22 = vst.msk [vmem:[#allocation0] sm:$0x1] %vm21, %v20
    %s23 = scalar_lea.vmem %s0, 12
    %v24 = vld [vmem:[%s23] sm:$0x1]
    %25 = vrot.lane.b32.xlu0 %v24, 96
    %v26 = vpop.permute.xlu0 %25
    %vm27 = vcmask 851712
    %28 = vst.msk [vmem:[#allocation0] sm:$0x1] %vm27, %v26
    %s29 = scalar_lea.vmem %s0, 11
    %v30 = vld [vmem:[%s29] sm:$0x1]
    %31 = vrot.lane.b32.xlu0 %v30, 88
    %v32 = vpop.permute.xlu0 %31
    %vm33 = vcmask 786112
    %34 = vst.msk [vmem:[#allocation0] sm:$0x1] %vm33, %v32
    %s35 = scalar_lea.vmem %s0, 10
    %v36 = vld [vmem:[%s35] sm:$0x1]
    %37 = vrot.lane.b32.xlu0 %v36, 80
    %v38 = vpop.permute.xlu0 %37
    %vm39 = vcmask 720512
    %40 = vst.msk [vmem:[#allocation0] sm:$0x1] %vm39, %v38
    %s41 = scalar_lea.vmem %s0, 9
    %v42 = vld [vmem:[%s41] sm:$0x1]
    %43 = vrot.lane.b32.xlu0 %v42, 72
    %v44 = vpop.permute.xlu0 %43
    %vm45 = vcmask 654912
    %46 = vst.msk [vmem:[#allocation0] sm:$0x1] %vm45, %v44
    %s47 = scalar_lea.vmem %s0, 8
    %v48 = vld [vmem:[%s47] sm:$0x1]
    %49 = vrot.lane.b32.xlu0 %v48, 64
    %v50 = vpop.permute.xlu0 %49
    %vm51 = vcmask 589312
    %52 = vst.msk [vmem:[#allocation0] sm:$0x1] %vm51, %v50
    %s53 = scalar_lea.vmem %s0, 7
    %v54 = vld [vmem:[%s53] sm:$0x1]
    %55 = vrot.lane.b32.xlu0 %v54, 56
    %v56 = vpop.permute.xlu0 %55
    %vm57 = vcmask 523712
    %58 = vst.msk [vmem:[#allocation0] sm:$0x1] %vm57, %v56
    %s59 = scalar_lea.vmem %s0, 6
    %v60 = vld [vmem:[%s59] sm:$0x1]
    %61 = vrot.lane.b32.xlu0 %v60, 48
    %v62 = vpop.permute.xlu0 %61
    %vm63 = vcmask 458112
    %64 = vst.msk [vmem:[#allocation0] sm:$0x1] %vm63, %v62
    %s65 = scalar_lea.vmem %s0, 5
    %v66 = vld [vmem:[%s65] sm:$0x1]
    %67 = vrot.lane.b32.xlu0 %v66, 40
    %v68 = vpop.permute.xlu0 %67
    %vm69 = vcmask 392512
    %70 = vst.msk [vmem:[#allocation0] sm:$0x1] %vm69, %v68
    %s71 = scalar_lea.vmem %s0, 4
    %v72 = vld [vmem:[%s71] sm:$0x1]
    %73 = vrot.lane.b32.xlu0 %v72, 32
    %v74 = vpop.permute.xlu0 %73
    %vm75 = vcmask 326912
    %76 = vst.msk [vmem:[#allocation0] sm:$0x1] %vm75, %v74
    %s77 = scalar_lea.vmem %s0, 3
    %v78 = vld [vmem:[%s77] sm:$0x1]
    %79 = vrot.lane.b32.xlu0 %v78, 24
    %v80 = vpop.permute.xlu0 %79
    %vm81 = vcmask 261312
    %82 = vst.msk [vmem:[#allocation0] sm:$0x1] %vm81, %v80
    %s83 = scalar_lea.vmem %s0, 2
    %v84 = vld [vmem:[%s83] sm:$0x1]
    %85 = vrot.lane.b32.xlu0 %v84, 16
    %v86 = vpop.permute.xlu0 %85
    %vm87 = vcmask 195712
    %88 = vst.msk [vmem:[#allocation0] sm:$0x1] %vm87, %v86
    %s89 = scalar_lea.vmem %s0, 1
    %v90 = vld [vmem:[%s89] sm:$0x1]
    %91 = vrot.lane.b32.xlu0 %v90, 8
    %v92 = vpop.permute.xlu0 %91
    %vm93 = vcmask 130112
    %94 = vst.msk [vmem:[#allocation0] sm:$0x1] %vm93, %v92
    %s96 = ssub.s32 2, 1
    %v97 = vld [vmem:[#allocation0] sm:%s96]
    %s99 = ssub.s32 2, 1
    %100 = vst [vmem:[%s1] sm:%s99] %v97

// kernel: acblock_forward.3
$region0: #{acblock_forward.3}
  #allocation0 [shape = 'u32[]', space=smem, size = 0x4, offset = 0x4, fixed_abs, tag = 'smem constant byte address 0x4 - core index']
  #allocation1 [shape = 'u32[72,128]{1,0:T(1,128)}', space=vmem, size = 0x9000, scoped, tag = 'internal scratch']
  %s0 = inlined_call_operand.vmem [shape: f32[2,2,10,72], index: 0, kind: input, shape index: {}]
  %s1 = inlined_call_operand.vmem [shape: f32[3,72,128], index: 1, kind: input, shape index: {}]
  %s2 = inlined_call_operand.vmem [shape: f32[1,128], index: 2, kind: input, shape index: {}]
  %s3 = inlined_call_operand.vmem [shape: f32[2,2,8,128], index: 3, kind: output, shape index: {}]
  %s4 = sld [smem:[#allocation0]]
  $region45: #{acblock_forward.3} parent=0
    _
  %s6 = ssub.s32 1, %s4
  %s7 = scalar_select 0, %s6, %s4
  loop: start=0, step=1, limit=6
  $region2: #{acblock_forward.3} parent=0 // loop_pre_header
    _
  $region3: #{acblock_forward.3} parent=0 // loop_header
    %s9 = sphi 0, %s13
    %p10 = scmp.ge.s32.totalorder %s9, 6
    %s16 = sphi 0, %s28
    %s17 = sphi 0, %s24
    %s18 = sphi 0, %s16
    %s19 = sphi 0, %s17
    %s20 = sphi 0, %s18
    %s21 = sphi 0, %s19
    %s33 = sphi 0, %s35
    %s36 = sphi 0, %s33
    %s37 = sphi 0, %s36
    %s53 = sphi 0, %s37
    %s57 = sphi 0, %s57
    %s59 = sphi 0, %s57
    %s60 = sphi 0, %s59
    %s74 = sphi 0, %s60
    %s78 = sphi 0, %s78
    %s80 = sphi 0, %s78
    %s81 = sphi 0, %s80
    %s95 = sphi 0, %s81
    %s103 = sphi 0, %s105
    %s106 = sphi 0, %s103
    %s107 = sphi 0, %s106
    %s123 = sphi 0, %s107
  $region4: #{acblock_forward.3} parent=0 // loop_header_branch
    %12 = sbr.rel (%p10) target = $region8
  $region5: #{acblock_forward.3} parent=0 // loop_body
    %s14 = ssub.s32 %s9, 1
    %s15 = ssub.s32 %s9, 2
    %s22 = sadd.s32 1, %s17
    %p23 = scmp.ge.s32.totalorder %s22, 2
    %s24 = scalar_select %p23, 0, %s22
    %s25 = sadd.s32 1, %s16
    %s26 = scalar_select %p23, %s25, %s16
    %p27 = scmp.ge.s32.totalorder %s26, 2
    %s28 = scalar_select %p27, 0, %s26
    %s29 = ssub.s32 %s16, %s28
    %s30 = ssub.s32 %s17, %s24
    %s31 = sor.u32 %s29, %s30
    %p32 = scmp.eq.s32.totalorder %s31, 0
    %s34 = sadd.s32 %s33, 1
    %s35 = scalar_select %p32, %s33, %s34
    %p38 = pneg %p32
    %p39 = scmp.eq.s32.totalorder %s9, 3
    %p40 = por %p38, %p39
    %p41 = scmp.ne.s32.totalorder %s33, %s36
    %p42 = scmp.eq.s32.totalorder %s9, 0
    %p43 = por %p41, %p42
    %p44 = scmp.ne.s32.totalorder %s33, %s36
    %p45 = scmp.eq.s32.totalorder %s14, 3
    %p46 = por %p44, %p45
    %p47 = scmp.ne.s32.totalorder %s36, %s37
    %p48 = scmp.eq.s32.totalorder %s14, 0
    %p49 = por %p47, %p48
    %p50 = scmp.ne.s32.totalorder %s36, %s37
    %p51 = scmp.eq.s32.totalorder %s15, 3
    %p52 = por %p50, %p51
    %p54 = scmp.ne.s32.totalorder %s37, %s53
    %p55 = scmp.eq.s32.totalorder %s15, 0
    %p56 = por %p54, %p55
    %s58 = sadd.s32 %s57, 1
    %p61 = scmp.eq.s32.totalorder %s9, 3
    %p62 = scmp.ne.s32.totalorder %s57, %s59
    %p63 = scmp.eq.s32.totalorder %s9, 0
    %p64 = por %p62, %p63
    %p65 = scmp.ne.s32.totalorder %s57, %s59
    %p66 = scmp.eq.s32.totalorder %s14, 3
    %p67 = por %p65, %p66
    %p68 = scmp.ne.s32.totalorder %s59, %s60
    %p69 = scmp.eq.s32.totalorder %s14, 0
    %p70 = por %p68, %p69
    %p71 = scmp.ne.s32.totalorder %s59, %s60
    %p72 = scmp.eq.s32.totalorder %s15, 3
    %p73 = por %p71, %p72
    %p75 = scmp.ne.s32.totalorder %s60, %s74
    %p76 = scmp.eq.s32.totalorder %s15, 0
    %p77 = por %p75, %p76
    %s79 = sadd.s32 %s78, 1
    %p82 = scmp.eq.s32.totalorder %s9, 3
    %p83 = scmp.ne.s32.totalorder %s78, %s80
    %p84 = scmp.eq.s32.totalorder %s9, 0
    %p85 = por %p83, %p84
    %p86 = scmp.ne.s32.totalorder %s78, %s80
    %p87 = scmp.eq.s32.totalorder %s14, 3
    %p88 = por %p86, %p87
    %p89 = scmp.ne.s32.totalorder %s80, %s81
    %p90 = scmp.eq.s32.totalorder %s14, 0
    %p91 = por %p89, %p90
    %p92 = scmp.ne.s32.totalorder %s80, %s81
    %p93 = scmp.eq.s32.totalorder %s15, 3
    %p94 = por %p92, %p93
    %p96 = scmp.ne.s32.totalorder %s81, %s95
    %p97 = scmp.eq.s32.totalorder %s15, 0
    %p98 = por %p96, %p97
    %s99 = ssub.s32 %s16, %s28
    %s100 = ssub.s32 %s17, %s24
    %s101 = sor.u32 %s99, %s100
    %p102 = scmp.eq.s32.totalorder %s101, 0
    %s104 = sadd.s32 %s103, 1
    %s105 = scalar_select %p102, %s103, %s104
    %p108 = pneg %p102
    %p109 = scmp.eq.s32.totalorder %s9, 3
    %p110 = por %p108, %p109
    %p111 = scmp.ne.s32.totalorder %s103, %s106
    %p112 = scmp.eq.s32.totalorder %s9, 0
    %p113 = por %p111, %p112
    %p114 = scmp.ne.s32.totalorder %s103, %s106
    %p115 = scmp.eq.s32.totalorder %s14, 3
    %p116 = por %p114, %p115
    %p117 = scmp.ne.s32.totalorder %s106, %s107
    %p118 = scmp.eq.s32.totalorder %s14, 0
    %p119 = por %p117, %p118
    %p120 = scmp.ne.s32.totalorder %s106, %s107
    %p121 = scmp.eq.s32.totalorder %s15, 3
    %p122 = por %p120, %p121
    %p124 = scmp.ne.s32.totalorder %s107, %s123
    %p125 = scmp.eq.s32.totalorder %s15, 0
    %p126 = por %p124, %p125
    %p127 = scmp.le.s32.totalorder 1, %s9
    %p128 = scmp.lt.s32.totalorder %s9, 5
    %p129 = pnand %p127, %p128
    %p130 = pneg %p129
    // Predicated region
    $region9: #{acblock_forward.3} parent=5 // pred_check
      _
    $region10: #{acblock_forward.3} parent=5 // pred_check_branch
      %132 = sbr.rel (%p129) target = $region12
    $region11: #{acblock_forward.3} parent=5 // pred_region
      %s133 = ssub.s32 %s9, 1
      // Predicated region
      $region13: #{acblock_forward.3} parent=11 // pred_check
        %p134 = pneg %p70
      $region14: #{acblock_forward.3} parent=11 // pred_check_branch
        %136 = sbr.rel (%p134) target = $region16
      $region15: #{acblock_forward.3} parent=11 // pred_region
        _
      $region16: #{acblock_forward.3} parent=11 // pred_fallthru
        _
      // Predicated region
      $region17: #{acblock_forward.3} parent=11 // pred_check
        %p137 = pneg %p91
      $region18: #{acblock_forward.3} parent=11 // pred_check_branch
        %139 = sbr.rel (%p137) target = $region20
      $region19: #{acblock_forward.3} parent=11 // pred_region
        _
      $region20: #{acblock_forward.3} parent=11 // pred_fallthru
        _
    $region12: #{acblock_forward.3} parent=5 // pred_fallthru
      _
    %p140 = scmp.lt.s32.totalorder %s9, 4
    // Predicated region
    $region21: #{acblock_forward.3} parent=5 // pred_check
      %p141 = pneg %p140
    $region22: #{acblock_forward.3} parent=5 // pred_check_branch
      %143 = sbr.rel (%p141) target = $region24
    $region23: #{acblock_forward.3} parent=5 // pred_region
      // Predicated region
      $region25: #{acblock_forward.3} parent=23 // pred_check
        %p144 = pneg %p43
      $region26: #{acblock_forward.3} parent=23 // pred_check_branch
        %146 = sbr.rel (%p144) target = $region28
      $region27: #{acblock_forward.3} parent=23 // pred_region
        %p147 = scmp.lt.s32.totalorder %s16, 1
        %s148 = scalar_select %p147, %s16, 1
        %p149 = scmp.lt.s32.totalorder %s17, 1
        %s150 = scalar_select %p149, %s17, 1
        %s151 = smul.addr %s150, 2
        %s152 = smul.addr %s148, 4
        %s153 = sadd.s32 %s151, %s152
        %s154 = smul.addr %s153, 8
        %s155 = scalar_lea.vmem %s0, %s154
      $region28: #{acblock_forward.3} parent=23 // pred_fallthru
        _
    $region24: #{acblock_forward.3} parent=5 // pred_fallthru
      _
    %p156 = scmp.le.s32.totalorder 1, %s9
    %p157 = scmp.lt.s32.totalorder %s9, 5
    %p158 = pnand %p156, %p157
    %p159 = pneg %p158
    // Predicated region
    $region29: #{acblock_forward.3} parent=5 // pred_check
      _
    $region30: #{acblock_forward.3} parent=5 // pred_check_branch
      %161 = sbr.rel (%p158) target = $region32
    $region31: #{acblock_forward.3} parent=5 // pred_region
      %s162 = ssub.s32 %s9, 1
      %p163 = scmp.lt.s32.totalorder %s18, 1
      %s164 = scalar_select %p163, %s18, 1
      %p165 = scmp.lt.s32.totalorder %s19, 1
      %s166 = scalar_select %p165, %s19, 1
      %s167 = smul.addr %s166, 2
      %s168 = smul.addr %s164, 4
      %s169 = sadd.s32 %s167, %s168
      %s170 = smul.addr %s169, 8
      %s171 = scalar_lea.vmem %s0, %s170
      %p172 = pneg %p49
      %p173 = pneg %p46
      %p174 = pneg %p70
      %p175 = pneg %p67
      %p176 = pneg %p91
      %p177 = pneg %p88
      %p178 = pneg %p119
      %p179 = pneg %p116
      %p180 = scmp.lt.s32.totalorder %s18, 1
      %s181 = scalar_select %p180, %s18, 1
      %p182 = scmp.lt.s32.totalorder %s19, 1
      %s183 = scalar_select %p182, %s19, 1
      %s184 = smul.addr %s181, 2
      %s185 = sadd.s32 %s183, %s184
      %s186 = smul.addr %s185, 8
      %s187 = scalar_lea.vmem %s3, %s186
      %p188 = scmp.lt.s32.totalorder %s18, 1
      %s189 = scalar_select %p188, %s18, 1
      %p190 = scmp.lt.s32.totalorder %s19, 1
      %s191 = scalar_select %p190, %s19, 1
      %s192 = smul.addr %s191, 2
      %s193 = smul.addr %s189, 4
      %s194 = sadd.s32 %s192, %s193
      %s195 = smul.addr %s194, 8
      %s196 = scalar_lea.vmem %s0, %s195
      %p197 = scmp.lt.s32.totalorder %s18, 1
      %s198 = scalar_select %p197, %s18, 1
      %p199 = scmp.lt.s32.totalorder %s19, 1
      %s200 = scalar_select %p199, %s19, 1
      %s201 = smul.addr %s198, 2
      %s202 = sadd.s32 %s200, %s201
      %s203 = smul.addr %s202, 8
      %s204 = scalar_lea.vmem %s3, %s203
      %v205 = vld [vmem:[%s196] sm:$0xff]
      %v206 = vld [vmem:[%s196 + $0x8] sm:$0x3]
      %v207 = vld [vmem:[%s1] sm:$0xff]
      %v208 = vld [vmem:[%s1 + $0x8] sm:$0xff]
      %v209 = vld [vmem:[%s1 + $0x10] sm:$0xff]
      %v210 = vld [vmem:[%s1 + $0x18] sm:$0xff]
      %v211 = vld [vmem:[%s1 + $0x20] sm:$0xff]
      %v212 = vld [vmem:[%s1 + $0x28] sm:$0xff]
      %v213 = vld [vmem:[%s1 + $0x30] sm:$0xff]
      %v214 = vld [vmem:[%s1 + $0x38] sm:$0xff]
      %v215 = vld [vmem:[%s1 + $0x40] sm:$0xff]
      %s216 = scalar_lea.vmem %s1, 72
      %v217 = vld [vmem:[%s216] sm:$0xff]
      %v218 = vld [vmem:[%s216 + $0x8] sm:$0xff]
      %v219 = vld [vmem:[%s216 + $0x10] sm:$0xff]
      %v220 = vld [vmem:[%s216 + $0x18] sm:$0xff]
      %v221 = vld [vmem:[%s216 + $0x20] sm:$0xff]
      %v222 = vld [vmem:[%s216 + $0x28] sm:$0xff]
      %v223 = vld [vmem:[%s216 + $0x30] sm:$0xff]
      %v224 = vld [vmem:[%s216 + $0x38] sm:$0xff]
      %v225 = vld [vmem:[%s216 + $0x40] sm:$0xff]
      %vm228 = vcmask 1046528
      %v229 = vrot.slane %v205, 1
      %v230 = vrot.slane %v206, 1
      %v231 = vsel %vm228, %v229, %v230
      %vm232 = vcmask 588800
      %v233 = vsel %vm232, %v231, 0
      %235 = vmatpush.msra.mxu0 0.0
      %236 = vmatpush.msra.mxu0 0.0
      %237 = vmatpush.msra.mxu0 0.0
      %238 = vmatpush.msra.mxu0 0.0
      %239 = vmatpush.msra.mxu0 0.0
      %240 = vmatpush.msra.mxu0 0.0
      %241 = vmatpush.msra.mxu0 0.0
      %242 = vmatpush.msra.mxu0 %v225
      %243 = vmatpush.msra.mxu0 %v224
      %244 = vmatpush.msra.mxu0 %v223
      %245 = vmatpush.msra.mxu0 %v222
      %246 = vmatpush.msra.mxu0 %v221
      %247 = vmatpush.msra.mxu0 %v220
      %248 = vmatpush.msra.mxu0 %v219
      %249 = vmatpush.msra.mxu0 %v218
      %250 = vmatpush.msra.mxu0 %v217
      %251 = vmatmul.f32.gmra.mxu0 %v233
      %v252 = vpop.f32.mrf.mxu0
      %v253 = vadd.f32 0.0, %v252
      %254 = vdwg.mxu0
      %v255 = vsel %vm232, %v205, 0
      %257 = vmatpush.msra.mxu0 0.0
      %258 = vmatpush.msra.mxu0 0.0
      %259 = vmatpush.msra.mxu0 0.0
      %260 = vmatpush.msra.mxu0 0.0
      %261 = vmatpush.msra.mxu0 0.0
      %262 = vmatpush.msra.mxu0 0.0
      %263 = vmatpush.msra.mxu0 0.0
      %264 = vmatpush.msra.mxu0 %v215
      %265 = vmatpush.msra.mxu0 %v214
      %266 = vmatpush.msra.mxu0 %v213
      %267 = vmatpush.msra.mxu0 %v212
      %268 = vmatpush.msra.mxu0 %v211
      %269 = vmatpush.msra.mxu0 %v210
      %270 = vmatpush.msra.mxu0 %v209
      %271 = vmatpush.msra.mxu0 %v208
      %272 = vmatpush.msra.mxu0 %v207
      %273 = vmatmul.f32.gmra.mxu0 %v255
      %v274 = vpop.f32.mrf.mxu0
      %v275 = vadd.f32 %v253, %v274
      %276 = vdwg.mxu0
      %s277 = scalar_lea.vmem %s1, 144
      %v278 = vld [vmem:[%s277] sm:$0xff]
      %v279 = vld [vmem:[%s277 + $0x8] sm:$0xff]
      %v280 = vld [vmem:[%s277 + $0x10] sm:$0xff]
      %v281 = vld [vmem:[%s277 + $0x18] sm:$0xff]
      %v282 = vld [vmem:[%s277 + $0x20] sm:$0xff]
      %v283 = vld [vmem:[%s277 + $0x28] sm:$0xff]
      %v284 = vld [vmem:[%s277 + $0x30] sm:$0xff]
      %v285 = vld [vmem:[%s277 + $0x38] sm:$0xff]
      %v286 = vld [vmem:[%s277 + $0x40] sm:$0xff]
      %vm287 = vcmask 1045504
      %v288 = vrot.slane %v205, 2
      %v289 = vrot.slane %v206, 2
      %v290 = vsel %vm287, %v288, %v289
      %v291 = vsel %vm232, %v290, 0
      %293 = vmatpush.msra.mxu0 0.0
      %294 = vmatpush.msra.mxu0 0.0
      %295 = vmatpush.msra.mxu0 0.0
      %296 = vmatpush.msra.mxu0 0.0
      %297 = vmatpush.msra.mxu0 0.0
      %298 = vmatpush.msra.mxu0 0.0
      %299 = vmatpush.msra.mxu0 0.0
      %300 = vmatpush.msra.mxu0 %v286
      %301 = vmatpush.msra.mxu0 %v285
      %302 = vmatpush.msra.mxu0 %v284
      %303 = vmatpush.msra.mxu0 %v283
      %304 = vmatpush.msra.mxu0 %v282
      %305 = vmatpush.msra.mxu0 %v281
      %306 = vmatpush.msra.mxu0 %v280
      %307 = vmatpush.msra.mxu0 %v279
      %308 = vmatpush.msra.mxu0 %v278
      %309 = vmatmul.f32.gmra.mxu0 %v291
      %v310 = vpop.f32.mrf.mxu0
      %v311 = vadd.f32 0.0, %v310
      %312 = vdwg.mxu0
      %v313 = vadd.f32 %v275, %v311
      %v314 = vld [vmem:[%s2] sm:$0x1]
      %v316 = vperm.slane %v314, 0
      %v318 = vadd.f32 %v313, %v316
      %319 = vst [vmem:[%s204] sm:$0xff] %v318
      %p320 = scmp.lt.s32.totalorder %s18, 1
      %s321 = scalar_select %p320, %s18, 1
      %p322 = scmp.lt.s32.totalorder %s19, 1
      %s323 = scalar_select %p322, %s19, 1
      %s324 = smul.addr %s321, 2
      %s325 = sadd.s32 %s323, %s324
      %s326 = smul.addr %s325, 8
      %s327 = scalar_lea.vmem %s3, %s326
      // Predicated region
      $region33: #{acblock_forward.3} parent=31 // pred_check
        %p328 = pneg %p116
      $region34: #{acblock_forward.3} parent=31 // pred_check_branch
        %330 = sbr.rel (%p328) target = $region36
      $region35: #{acblock_forward.3} parent=31 // pred_region
        _
      $region36: #{acblock_forward.3} parent=31 // pred_fallthru
        _
    $region32: #{acblock_forward.3} parent=5 // pred_fallthru
      _
    %p331 = scmp.le.s32.totalorder 2, %s9
    // Predicated region
    $region37: #{acblock_forward.3} parent=5 // pred_check
      %p332 = pneg %p331
    $region38: #{acblock_forward.3} parent=5 // pred_check_branch
      %334 = sbr.rel (%p332) target = $region40
    $region39: #{acblock_forward.3} parent=5 // pred_region
      %s335 = ssub.s32 %s9, 2
      // Predicated region
      $region41: #{acblock_forward.3} parent=39 // pred_check
        %p336 = pneg %p122
      $region42: #{acblock_forward.3} parent=39 // pred_check_branch
        %338 = sbr.rel (%p336) target = $region44
      $region43: #{acblock_forward.3} parent=39 // pred_region
        %p339 = scmp.lt.s32.totalorder %s20, 1
        %s340 = scalar_select %p339, %s20, 1
        %p341 = scmp.lt.s32.totalorder %s21, 1
        %s342 = scalar_select %p341, %s21, 1
        %s343 = smul.addr %s340, 2
        %s344 = sadd.s32 %s342, %s343
        %s345 = smul.addr %s344, 8
        %s346 = scalar_lea.vmem %s3, %s345
      $region44: #{acblock_forward.3} parent=39 // pred_fallthru
        _
    $region40: #{acblock_forward.3} parent=5 // pred_fallthru
      _
  $region6: #{acblock_forward.3} parent=0 // loop_footer
    %s13 = sadd.s32 1, %s9
  $region7: #{acblock_forward.3} parent=0 // loop_footer_branch
    %8 = sbr.rel target = $region3
  $region8: #{acblock_forward.3} parent=0 // loop_exit
    _

</llo_original>
